<compile_context>
chip_gen: v6e
topology: v6e:2x2x1
jax: 0.10.0
libtpu: 0.0.40
codegen_flags: <defaults>
</compile_context>

<pallas_src>
import numpy as np
import jax
import jax.numpy as jnp
from jax.experimental import pallas as pl
from jax.experimental.pallas import tpu as pltpu

VOXEL_SIZE = 8                       # module hyper-parameter (voxel_size)
_V3 = VOXEL_SIZE ** 3                # 512 cells
_NLANES = 128                        # lo-factor width (lane axis of the one-hot)
_NHI = _V3 // _NLANES                # 4 hi-factor values
_LO_BITS = 7                         # log2(_NLANES)
_MAX_TN = 8192                       # point-tile cap (per-grid-step overhead ~0.35us)
assert _V3 % _NLANES == 0


# ----------------------------------------------------------------------------
# neighbour_voxel_list: pure compile-time constant (hoisted out of the hot path)
# ----------------------------------------------------------------------------
def _build_neighbour_table(v):
    coords = np.stack(
        np.meshgrid(np.arange(v), np.arange(v), np.arange(v), indexing="ij"),
        axis=-1)                                                   # (v,v,v,3)
    moves = np.stack(
        np.meshgrid([-1, 0, 1], [-1, 0, 1], [-1, 0, 1], indexing="ij"),
        axis=-1).reshape(27, 3)                                    # reference order
    table = coords[:, :, :, None, :] + moves[None, None, None, :, :]
    return jnp.asarray(table, dtype=jnp.float32)                   # (v,v,v,27,3)


_NEIGHBOUR_TABLE = _build_neighbour_table(VOXEL_SIZE)


# ----------------------------------------------------------------------------
# Static tiling of the point axis
# ----------------------------------------------------------------------------
def _round_up(n, m):
    return -(-n // m) * m


def _tiling(b, n):
    """Returns (TN, Npad, S, T, CH) with Npad = S * T * TN and CH | TN."""
    npad = _round_up(n, 128)
    if npad <= _MAX_TN:
        tn = npad                                  # single big tile per batch
    else:
        npad = _round_up(n, 1024)                  # bounded padding waste
        tn = max(c for c in (8192, 4096, 2048, 1024) if npad % c == 0)
    ttot = npad // tn
    # v7x: if the batch axis alone can't feed both TensorCores, split the point
    # axis 2-way and mark it parallel as well (partial masks combined in XLA).
    if b % 2 == 1 and ttot % 2 == 1 and tn % 256 == 0:
        tn //= 2
        ttot = npad // tn
    s = 2 if ttot % 2 == 0 else 1
    t = ttot // s
    ch = 256 if tn % 256 == 0 else 128             # 256-deep chunks fill v6e MXU K
    return tn, npad, s, t, ch


# ----------------------------------------------------------------------------
# Occupancy kernel: per (batch, segment) cell counts over the V^3 grid
# ----------------------------------------------------------------------------
def _make_occupancy_call(B, Npad, TN, S, T, CH):
    V = VOXEL_SIZE
    scale = float(V - 1)
    n_chunks = TN // CH

    def kernel(pc_ref, cnt_ref):
        # pc_ref : (1, TN, 3) f32   natural-layout point tile
        # cnt_ref: (1, 1, 128, 4) f32  [lo, hi] cell counts for this (batch, segment);
        #          resident accumulator across the point-tile ("arbitrary") axis.
        t = pl.program_id(2)

        @pl.when(t == 0)
        def _init():
            cnt_ref[...] = jnp.zeros_like(cnt_ref)

        lo_iota = jax.lax.broadcasted_iota(jnp.int32, (CH, _NLANES), 1)
        hi_iota = jax.lax.broadcasted_iota(jnp.int32, (CH, _NHI), 1)

        def chunk_body(c, counts):
            start = pl.multiple_of(c * CH, CH) if n_chunks > 1 else 0
            p = pc_ref[0, pl.ds(start, CH), :]                        # (CH, 3)
            v = (p * scale).astype(jnp.int32)                         # trunc == torch .int()
            key = v[:, 0:1] * (V * V) + v[:, 1:2] * V + v[:, 2:3]     # (CH, 1) in [0,511]
            # Factored one-hot: key = hi*128 + lo.  Padded / out-of-range points
            # produce hi outside [0, 4) and therefore hit no cell.
            oh_lo = ((key & (_NLANES - 1)) == lo_iota).astype(jnp.float32)   # (CH,128)
            oh_hi = ((key >> _LO_BITS) == hi_iota).astype(jnp.float32)       # (CH,4)
            # Outer product over the point axis on the MXU:
            #   counts[lo, hi] += sum_p oh_lo[p, lo] * oh_hi[p, hi]
            upd = jax.lax.dot_general(
                oh_lo, oh_hi, (((0,), (0,)), ((), ())),
                preferred_element_type=jnp.float32)                   # (128, 4)
            return counts + upd

        counts0 = jnp.zeros((_NLANES, _NHI), dtype=jnp.float32)
        if n_chunks == 1:
            counts = chunk_body(0, counts0)
        else:
            counts = jax.lax.fori_loop(0, n_chunks, chunk_body, counts0,
                                       unroll=min(n_chunks, 4))
        cnt_ref[...] += counts.reshape(1, 1, _NLANES, _NHI)

    grid_spec = pltpu.PrefetchScalarGridSpec(
        num_scalar_prefetch=0,
        grid=(B, S, T),
        in_specs=[pl.BlockSpec((1, TN, 3), lambda b, s, t: (b, s * T + t, 0))],
        out_specs=pl.BlockSpec((1, 1, _NLANES, _NHI), lambda b, s, t: (b, s, 0, 0)),
    )
    return pl.pallas_call(
        kernel,
        grid_spec=grid_spec,
        out_shape=jax.ShapeDtypeStruct((B, S, _NLANES, _NHI), jnp.float32),
        compiler_params=pltpu.CompilerParams(
            dimension_semantics=("parallel", "parallel", "arbitrary")),
    )


# ----------------------------------------------------------------------------
# Forward wrapper
# ----------------------------------------------------------------------------
@jax.jit
def voxel_module_forward(point_cloud):
    B, N, _ = point_cloud.shape
    V = VOXEL_SIZE

    # Voxelize / sort: one fused XLA elementwise pass + sort on the natural layout
    # (no kernel writeback, no transposes).
    vox = (point_cloud * (V - 1)).astype(jnp.int32)               # trunc == torch .int()
    keys = vox[..., 0] * (V * V) + vox[..., 1] * V + vox[..., 2]  # same order as
    #                                                             # x*10000 + y*100 + z
    sorted_point_indexes = jnp.argsort(keys, axis=1, stable=True)
    # TODO(synk): the ragged per-batch dict {voxel -> [point ids]} has no dense Pallas
    # equivalent; consumers rebuild the groups from (vox, sorted_point_indexes).

    # Occupancy mask: fused Pallas kernel over padded, tiled points.
    TN, Npad, S, T, CH = _tiling(B, N)
    if Npad != N:
        # sentinel 2.0 -> voxel coord 14 -> flat key 1022 -> hi out of range -> no hit
        pc_pad = jnp.pad(point_cloud, ((0, 0), (0, Npad - N), (0, 0)),
                         constant_values=2.0)
    else:
        pc_pad = point_cloud
    parts = _make_occupancy_call(B, Npad, TN, S, T, CH)(pc_pad)   # (B, S, 128, 4)

    counts = jnp.sum(parts, axis=1)                               # (B, 128, 4) [lo, hi]
    occ = jnp.transpose(counts, (0, 2, 1)).reshape(B, _V3) > 0.0  # flat-key order
    # Reference quirk: the last sorted voxel group is never committed, so the occupied
    # cell with the maximum flat key keeps mask == 0.
    cell_ids = jnp.arange(_V3, dtype=jnp.int32)
    last = jnp.max(jnp.where(occ, cell_ids, -1), axis=-1, keepdims=True)
    mask = jnp.where(occ & (cell_ids[None, :] != last), 1.0, 0.0)
    mask = mask.astype(jnp.float32).reshape(B, V, V, V)

    # Compile-time constant table; the per-batch broadcast only matches the reference
    # return shape.  Consumers that accept (V,V,V,27,3) can read _NEIGHBOUR_TABLE.
    nbr_batched = jnp.broadcast_to(_NEIGHBOUR_TABLE[None], (B, V, V, V, 27, 3))

    return (vox, sorted_point_indexes), nbr_batched, mask


# ----------------------------------------------------------------------------
# Self-test against a numpy implementation of the PyTorch semantics
# ----------------------------------------------------------------------------
def _reference_check(point_cloud, vox, sorted_idx, nbr, mask):
    V = VOXEL_SIZE
    pc_np = np.asarray(point_cloud)
    B = pc_np.shape[0]

    vox_np = (pc_np * (V - 1)).astype(np.int32)
    assert np.array_equal(np.asarray(vox), vox_np)

    mask_np = np.zeros((B, V, V, V), np.float32)
    for b in range(B):
        keys_b = vox_np[b, :, 0] * 10000 + vox_np[b, :, 1] * 100 + vox_np[b, :, 2]
        assert np.array_equal(np.asarray(sorted_idx)[b],
                              np.argsort(keys_b, kind="stable"))
        maxk = keys_b.max()
        for x, y, z in vox_np[b][keys_b != maxk]:   # last sorted group never committed
            mask_np[b, x, y, z] = 1.0
    assert np.array_equal(np.asarray(mask), mask_np)

    moves = np.array(
        [[-1, -1, -1], [-1, -1, 0], [-1, -1, 1], [-1, 0, -1], [-1, 0, 0], [-1, 0, 1],
         [-1, 1, -1], [-1, 1, 0], [-1, 1, 1], [0, -1, -1], [0, -1, 0], [0, -1, 1],
         [0, 0, -1], [0, 0, 0], [0, 0, 1], [0, 1, -1], [0, 1, 0], [0, 1, 1],
         [1, -1, -1], [1, -1, 0], [1, -1, 1], [1, 0, -1], [1, 0, 0], [1, 0, 1],
         [1, 1, -1], [1, 1, 0], [1, 1, 1]], dtype=np.float32)
    coords = np.stack(
        np.meshgrid(np.arange(V), np.arange(V), np.arange(V), indexing="ij"),
        axis=-1).astype(np.float32)
    nbr_ref = coords[:, :, :, None, :] + moves[None, None, None, :, :]
    nbr_np = np.asarray(nbr)
    assert nbr_np.shape == (B, V, V, V, 27, 3)
    for b in range(B):
        assert np.array_equal(nbr_np[b], nbr_ref)


if __name__ == "__main__":
    rng = jax.random.PRNGKey(0)
    k1, k2 = jax.random.split(rng)

    # Case 1: tiny shape matching the module's usage (batch=2, num_points=8).
    pc1 = jax.random.uniform(k1, (2, 8, 3), dtype=jnp.float32)
    (vox1, idx1), nbr1, mask1 = voxel_module_forward(pc1)
    jax.block_until_ready((vox1, idx1, nbr1, mask1))
    assert vox1.shape == (2, 8, 3) and vox1.dtype == jnp.int32
    assert idx1.shape == (2, 8)
    assert nbr1.shape == (2, VOXEL_SIZE, VOXEL_SIZE, VOXEL_SIZE, 27, 3)
    assert nbr1.dtype == jnp.float32
    assert mask1.shape == (2, VOXEL_SIZE, VOXEL_SIZE, VOXEL_SIZE)
    assert mask1.dtype == jnp.float32
    _reference_check(pc1, vox1, idx1, nbr1, mask1)

    # Case 2: exercises N-padding (200 -> 256) and the 2-way point-axis core split.
    pc2 = jax.random.uniform(k2, (1, 200, 3), dtype=jnp.float32)
    (vox2, idx2), nbr2, mask2 = voxel_module_forward(pc2)
    jax.block_until_ready((vox2, idx2, nbr2, mask2))
    _reference_check(pc2, vox2, idx2, nbr2, mask2)

    print("KERNEL_OK")
</pallas_src>

<mosaic_0001>
module attributes {stable_mosaic.version = 11 : i64} {
  func.func @kernel(%arg0: i32, %arg1: i32, %arg2: i32, %arg3: memref<1x128x3xf32, #tpu.memory_space<vmem>>, %arg4: memref<1x1x128x4xf32, #tpu.memory_space<vmem>>) attributes {dimension_semantics = [#tpu.dimension_semantics<parallel>, #tpu.dimension_semantics<parallel>, #tpu.dimension_semantics<arbitrary>], iteration_bounds = array<i64: 2, 1, 1>, scalar_prefetch = 0 : i64, scratch_operands = 0 : i64, tpu.core_type = #tpu.core_type<tc>, window_params = [{transform_indices = @transform_0, window_bounds = array<i64: 1, 128, 3>}, {transform_indices = @transform_1, window_bounds = array<i64: 1, 1, 128, 4>}]} {
    %c0_i32 = arith.constant 0 : i32
    %0 = arith.cmpi eq, %arg2, %c0_i32 : i32
    %1 = arith.extui %0 : i1 to i32
    %c0_i32_0 = arith.constant 0 : i32
    %2 = arith.cmpi ne, %1, %c0_i32_0 : i32
    scf.if %2 {
      %cst_13 = arith.constant 0.000000e+00 : f32
      %38 = vector.broadcast %cst_13 : f32 to vector<1x1x128x4xf32>
      %c0_14 = arith.constant 0 : index
      %c0_15 = arith.constant 0 : index
      %c0_16 = arith.constant 0 : index
      %c0_17 = arith.constant 0 : index
      %39 = vector.load %arg4[%c0_14, %c0_15, %c0_16, %c0_17] : memref<1x1x128x4xf32, #tpu.memory_space<vmem>>, vector<1x1x128x4xf32>
      tpu.vector_store %arg4[%c0_14, %c0_15, %c0_16, %c0_17], %38 {strides = array<i32>} : memref<1x1x128x4xf32, #tpu.memory_space<vmem>>, vector<1x1x128x4xf32>,
    } else {
    }
    %3 = tpu.iota {dimensions = array<i32: 1>} : vector<128x128xi32>
    %4 = tpu.iota {dimensions = array<i32: 1>} : vector<128x4xi32>
    %cst = arith.constant 0.000000e+00 : f32
    %5 = vector.broadcast %cst : f32 to vector<128x4xf32>
    %c0 = arith.constant 0 : index
    %c0_1 = arith.constant 0 : index
    %c0_2 = arith.constant 0 : index
    %6 = vector.load %arg3[%c0, %c0_1, %c0_2] : memref<1x128x3xf32, #tpu.memory_space<vmem>>, vector<1x128x3xf32>
    %7 = vector.shape_cast %6 : vector<1x128x3xf32> to vector<128x3xf32>
    %cst_3 = arith.constant 7.000000e+00 : f32
    %8 = vector.broadcast %cst_3 : f32 to vector<128x3xf32>
    %9 = arith.mulf %7, %8 : vector<128x3xf32>
    %10 = arith.fptosi %9 : vector<128x3xf32> to vector<128x3xi32>
    %11 = vector.extract_strided_slice %10 {offsets = [0, 0], sizes = [128, 1], strides = [1, 1]} : vector<128x3xi32> to vector<128x1xi32>
    %c64_i32 = arith.constant 64 : i32
    %12 = vector.broadcast %c64_i32 : i32 to vector<128x1xi32>
    %13 = arith.muli %11, %12 : vector<128x1xi32>
    %14 = vector.extract_strided_slice %10 {offsets = [0, 1], sizes = [128, 1], strides = [1, 1]} : vector<128x3xi32> to vector<128x1xi32>
    %c8_i32 = arith.constant 8 : i32
    %15 = vector.broadcast %c8_i32 : i32 to vector<128x1xi32>
    %16 = arith.muli %14, %15 : vector<128x1xi32>
    %17 = arith.addi %13, %16 : vector<128x1xi32>
    %18 = vector.extract_strided_slice %10 {offsets = [0, 2], sizes = [128, 1], strides = [1, 1]} : vector<128x3xi32> to vector<128x1xi32>
    %19 = arith.addi %17, %18 : vector<128x1xi32>
    %c127_i32 = arith.constant 127 : i32
    %20 = vector.broadcast %c127_i32 : i32 to vector<128x1xi32>
    %21 = arith.andi %19, %20 : vector<128x1xi32>
    %22 = vector.broadcast %21 : vector<128x1xi32> to vector<128x128xi32>
    %23 = arith.cmpi eq, %22, %3 : vector<128x128xi32>
    %24 = arith.extui %23 : vector<128x128xi1> to vector<128x128xi32>
    %25 = arith.sitofp %24 : vector<128x128xi32> to vector<128x128xf32>
    %c7_i32 = arith.constant 7 : i32
    %26 = vector.broadcast %c7_i32 : i32 to vector<128x1xi32>
    %27 = arith.shrsi %19, %26 : vector<128x1xi32>
    %28 = vector.broadcast %27 : vector<128x1xi32> to vector<128x4xi32>
    %29 = arith.cmpi eq, %28, %4 : vector<128x4xi32>
    %30 = arith.extui %29 : vector<128x4xi1> to vector<128x4xi32>
    %31 = arith.sitofp %30 : vector<128x4xi32> to vector<128x4xf32>
    %cst_4 = arith.constant dense<0.000000e+00> : vector<128x4xf32>
    %32 = tpu.matmul %25, %31, %cst_4 {dimension_numbers = #tpu.dot_dimension_numbers<[0], [0], [1], [1], [0, 1, 1, 1], [], []>} : vector<128x128xf32>, vector<128x4xf32>, vector<128x4xf32> -> vector<128x4xf32>
    %33 = arith.addf %5, %32 : vector<128x4xf32>
    %c0_5 = arith.constant 0 : index
    %c0_6 = arith.constant 0 : index
    %c0_7 = arith.constant 0 : index
    %c0_8 = arith.constant 0 : index
    %34 = vector.load %arg4[%c0_5, %c0_6, %c0_7, %c0_8] : memref<1x1x128x4xf32, #tpu.memory_space<vmem>>, vector<1x1x128x4xf32>
    %35 = vector.shape_cast %33 : vector<128x4xf32> to vector<1x1x128x4xf32>
    %36 = arith.addf %34, %35 : vector<1x1x128x4xf32>
    %c0_9 = arith.constant 0 : index
    %c0_10 = arith.constant 0 : index
    %c0_11 = arith.constant 0 : index
    %c0_12 = arith.constant 0 : index
    %37 = vector.load %arg4[%c0_9, %c0_10, %c0_11, %c0_12] : memref<1x1x128x4xf32, #tpu.memory_space<vmem>>, vector<1x1x128x4xf32>
    tpu.vector_store %arg4[%c0_9, %c0_10, %c0_11, %c0_12], %36 {strides = array<i32>} : memref<1x1x128x4xf32, #tpu.memory_space<vmem>>, vector<1x1x128x4xf32>,
    return
  }
  func.func @transform_0(%arg0: i32, %arg1: i32, %arg2: i32) -> (i32, i32, i32) {
    %c1_i32 = arith.constant 1 : i32
    %0 = arith.muli %arg1, %c1_i32 : i32
    %1 = arith.addi %0, %arg2 : i32
    %c0_i32 = arith.constant 0 : i32
    %c0_i32_0 = arith.constant 0 : i32
    return %arg0, %1, %c0_i32 : i32, i32, i32
  }
  func.func @transform_1(%arg0: i32, %arg1: i32, %arg2: i32) -> (i32, i32, i32, i32) {
    %c0_i32 = arith.constant 0 : i32
    %c0_i32_0 = arith.constant 0 : i32
    %c0_i32_1 = arith.constant 0 : i32
    return %arg0, %arg1, %c0_i32, %c0_i32_0 : i32, i32, i32, i32
  }
}

</mosaic_0001>

<llo_original>
// kernel: voxel_module_forward.1
$region0: #{voxel_module_forward.1}
  #allocation0 [shape = 'u32[]', space=smem, size = 0x4, offset = 0x4, fixed_abs, tag = 'smem constant byte address 0x4 - core index']
  #allocation1 [shape = 'u32[144,128]{1,0:T(1,128)}', space=vmem, size = 0x12000, scoped, tag = 'internal scratch']
  %s0 = inlined_call_operand.vmem [shape: f32[2,128,3], index: 0, kind: input, shape index: {}]
  %s1 = inlined_call_operand.vmem [shape: f32[2,1,128,4], index: 1, kind: output, shape index: {}]
  %s2 = sld [smem:[#allocation0]]
  $region41: #{voxel_module_forward.1} parent=0
    _
  %s4 = ssub.s32 1, %s2
  %s5 = scalar_select 0, %s4, %s2
  loop: start=0, step=1, limit=4
  $region2: #{voxel_module_forward.1} parent=0 // loop_pre_header
    _
  $region3: #{voxel_module_forward.1} parent=0 // loop_header
    %s7 = sphi 0, %s11
    %p8 = scmp.ge.s32.totalorder %s7, 4
    %s14 = sphi 0, %s33
    %s15 = sphi 0, %s29
    %s16 = sphi 0, %s25
    %s17 = sphi 0, %s14
    %s18 = sphi 0, %s15
    %s19 = sphi 0, %s16
    %s20 = sphi 0, %s17
    %s21 = sphi 0, %s18
    %s22 = sphi 0, %s19
    %s40 = sphi 0, %s42
    %s43 = sphi 0, %s40
    %s44 = sphi 0, %s43
    %s60 = sphi 0, %s44
    %s68 = sphi 0, %s70
    %s71 = sphi 0, %s68
    %s72 = sphi 0, %s71
    %s88 = sphi 0, %s72
  $region4: #{voxel_module_forward.1} parent=0 // loop_header_branch
    %10 = sbr.rel (%p8) target = $region8
  $region5: #{voxel_module_forward.1} parent=0 // loop_body
    %s12 = ssub.s32 %s7, 1
    %s13 = ssub.s32 %s7, 2
    %s23 = sadd.s32 1, %s16
    %p24 = scmp.ge.s32.totalorder %s23, 1
    %s25 = scalar_select %p24, 0, %s23
    %s26 = sadd.s32 1, %s15
    %s27 = scalar_select %p24, %s26, %s15
    %p28 = scmp.ge.s32.totalorder %s27, 1
    %s29 = scalar_select %p28, 0, %s27
    %s30 = sadd.s32 1, %s14
    %s31 = scalar_select %p28, %s30, %s14
    %p32 = scmp.ge.s32.totalorder %s31, 2
    %s33 = scalar_select %p32, 0, %s31
    %s34 = sadd.s32 %s15, %s16
    %s35 = sadd.s32 %s29, %s25
    %s36 = ssub.s32 %s14, %s33
    %s37 = ssub.s32 %s34, %s35
    %s38 = sor.u32 %s36, %s37
    %p39 = scmp.eq.s32.totalorder %s38, 0
    %s41 = sadd.s32 %s40, 1
    %s42 = scalar_select %p39, %s40, %s41
    %p45 = pneg %p39
    %p46 = scmp.eq.s32.totalorder %s7, 1
    %p47 = por %p45, %p46
    %p48 = scmp.ne.s32.totalorder %s40, %s43
    %p49 = scmp.eq.s32.totalorder %s7, 0
    %p50 = por %p48, %p49
    %p51 = scmp.ne.s32.totalorder %s40, %s43
    %p52 = scmp.eq.s32.totalorder %s12, 1
    %p53 = por %p51, %p52
    %p54 = scmp.ne.s32.totalorder %s43, %s44
    %p55 = scmp.eq.s32.totalorder %s12, 0
    %p56 = por %p54, %p55
    %p57 = scmp.ne.s32.totalorder %s43, %s44
    %p58 = scmp.eq.s32.totalorder %s13, 1
    %p59 = por %p57, %p58
    %p61 = scmp.ne.s32.totalorder %s44, %s60
    %p62 = scmp.eq.s32.totalorder %s13, 0
    %p63 = por %p61, %p62
    %s64 = ssub.s32 %s14, %s33
    %s65 = ssub.s32 %s15, %s29
    %s66 = sor.u32 %s64, %s65
    %p67 = scmp.eq.s32.totalorder %s66, 0
    %s69 = sadd.s32 %s68, 1
    %s70 = scalar_select %p67, %s68, %s69
    %p73 = pneg %p67
    %p74 = scmp.eq.s32.totalorder %s7, 1
    %p75 = por %p73, %p74
    %p76 = scmp.ne.s32.totalorder %s68, %s71
    %p77 = scmp.eq.s32.totalorder %s7, 0
    %p78 = por %p76, %p77
    %p79 = scmp.ne.s32.totalorder %s68, %s71
    %p80 = scmp.eq.s32.totalorder %s12, 1
    %p81 = por %p79, %p80
    %p82 = scmp.ne.s32.totalorder %s71, %s72
    %p83 = scmp.eq.s32.totalorder %s12, 0
    %p84 = por %p82, %p83
    %p85 = scmp.ne.s32.totalorder %s71, %s72
    %p86 = scmp.eq.s32.totalorder %s13, 1
    %p87 = por %p85, %p86
    %p89 = scmp.ne.s32.totalorder %s72, %s88
    %p90 = scmp.eq.s32.totalorder %s13, 0
    %p91 = por %p89, %p90
    %p92 = scmp.le.s32.totalorder 1, %s7
    %p93 = scmp.lt.s32.totalorder %s7, 3
    %p94 = pnand %p92, %p93
    %p95 = pneg %p94
    // Predicated region
    $region9: #{voxel_module_forward.1} parent=5 // pred_check
      _
    $region10: #{voxel_module_forward.1} parent=5 // pred_check_branch
      %97 = sbr.rel (%p94) target = $region12
    $region11: #{voxel_module_forward.1} parent=5 // pred_region
      %s98 = ssub.s32 %s7, 1
    $region12: #{voxel_module_forward.1} parent=5 // pred_fallthru
      _
    %p99 = scmp.lt.s32.totalorder %s7, 2
    // Predicated region
    $region13: #{voxel_module_forward.1} parent=5 // pred_check
      %p100 = pneg %p99
    $region14: #{voxel_module_forward.1} parent=5 // pred_check_branch
      %102 = sbr.rel (%p100) target = $region16
    $region15: #{voxel_module_forward.1} parent=5 // pred_region
      // Predicated region
      $region17: #{voxel_module_forward.1} parent=15 // pred_check
        %p103 = pneg %p50
      $region18: #{voxel_module_forward.1} parent=15 // pred_check_branch
        %105 = sbr.rel (%p103) target = $region20
      $region19: #{voxel_module_forward.1} parent=15 // pred_region
        %s106 = sadd.s32 %s15, %s16
        %s107 = smul.u32 16, %s106
        %p108 = scmp.lt.s32.totalorder %s14, 1
        %s109 = scalar_select %p108, %s14, 1
        %p110 = scmp.lt.s32.totalorder %s107, 15
        %s111 = scalar_select %p110, %s107, 15
        %s112 = smul.addr %s109, 16
        %s113 = sadd.s32 %s111, %s112
        %s114 = smul.addr %s113, 8
        %s115 = scalar_lea.vmem %s0, %s114
        %s116 = sadd.s32 %s15, %s16
        %s117 = smul.u32 16, %s116
      $region20: #{voxel_module_forward.1} parent=15 // pred_fallthru
        _
    $region16: #{voxel_module_forward.1} parent=5 // pred_fallthru
      _
    %p118 = scmp.le.s32.totalorder 1, %s7
    %p119 = scmp.lt.s32.totalorder %s7, 3
    %p120 = pnand %p118, %p119
    %p121 = pneg %p120
    // Predicated region
    $region21: #{voxel_module_forward.1} parent=5 // pred_check
      _
    $region22: #{voxel_module_forward.1} parent=5 // pred_check_branch
      %123 = sbr.rel (%p120) target = $region24
    $region23: #{voxel_module_forward.1} parent=5 // pred_region
      %s124 = ssub.s32 %s7, 1
      %s125 = sadd.s32 %s18, %s19
      %s126 = smul.u32 16, %s125
      %p127 = scmp.lt.s32.totalorder %s17, 1
      %s128 = scalar_select %p127, %s17, 1
      %p129 = scmp.lt.s32.totalorder %s126, 15
      %s130 = scalar_select %p129, %s126, 15
      %s131 = smul.addr %s128, 16
      %s132 = sadd.s32 %s130, %s131
      %s133 = smul.addr %s132, 8
      %s134 = scalar_lea.vmem %s0, %s133
      %p135 = pneg %p56
      %p136 = pneg %p53
      %p137 = pneg %p84
      %p138 = pneg %p81
      %p139 = scmp.lt.s32.totalorder %s17, 1
      %s140 = scalar_select %p139, %s17, 1
      %p141 = scmp.lt.s32.totalorder %s18, 0
      %s142 = scalar_select %p141, %s18, 0
      %s143 = smul.addr %s142, 16
      %s144 = smul.addr %s140, 16
      %s145 = sadd.s32 %s143, %s144
      %s146 = smul.addr %s145, 8
      %s147 = scalar_lea.vmem %s1, %s146
      %s148 = sadd.s32 %s18, %s19
      %s149 = smul.u32 16, %s148
      %p150 = scmp.lt.s32.totalorder %s17, 1
      %s151 = scalar_select %p150, %s17, 1
      %p152 = scmp.lt.s32.totalorder %s149, 15
      %s153 = scalar_select %p152, %s149, 15
      %s154 = smul.addr %s151, 16
      %s155 = sadd.s32 %s153, %s154
      %s156 = smul.addr %s155, 8
      %s157 = scalar_lea.vmem %s0, %s156
      %s158 = sadd.s32 %s18, %s19
      %s159 = smul.u32 16, %s158
      %p160 = scmp.lt.s32.totalorder %s17, 1
      %s161 = scalar_select %p160, %s17, 1
      %p162 = scmp.lt.s32.totalorder %s18, 0
      %s163 = scalar_select %p162, %s18, 0
      %s164 = smul.addr %s163, 16
      %s165 = smul.addr %s161, 16
      %s166 = sadd.s32 %s164, %s165
      %s167 = smul.addr %s166, 8
      %s168 = scalar_lea.vmem %s1, %s167
      %p169 = scmp.eq.s32.totalorder %s19, 0
      // Predicated region
      $region25: #{voxel_module_forward.1} parent=23 // pred_check
        %p170 = pneg %p169
      $region26: #{voxel_module_forward.1} parent=23 // pred_check_branch
        %172 = sbr.rel (%p170) target = $region28
      $region27: #{voxel_module_forward.1} parent=23 // pred_region
        %vm173 = vcmask 31744
        %174 = vst.msk [vmem:[%s168] sm:$0xff] %vm173, 0.0
        %175 = vst.msk [vmem:[%s168 + $0x8] sm:$0xff] %vm173, 0.0
        %176 = vst.msk [vmem:[%s168 + $0x10] sm:$0xff] %vm173, 0.0
        %177 = vst.msk [vmem:[%s168 + $0x18] sm:$0xff] %vm173, 0.0
        %178 = vst.msk [vmem:[%s168 + $0x20] sm:$0xff] %vm173, 0.0
        %179 = vst.msk [vmem:[%s168 + $0x28] sm:$0xff] %vm173, 0.0
        %180 = vst.msk [vmem:[%s168 + $0x30] sm:$0xff] %vm173, 0.0
        %181 = vst.msk [vmem:[%s168 + $0x38] sm:$0xff] %vm173, 0.0
        %182 = vst.msk [vmem:[%s168 + $0x40] sm:$0xff] %vm173, 0.0
        %183 = vst.msk [vmem:[%s168 + $0x48] sm:$0xff] %vm173, 0.0
        %184 = vst.msk [vmem:[%s168 + $0x50] sm:$0xff] %vm173, 0.0
        %185 = vst.msk [vmem:[%s168 + $0x58] sm:$0xff] %vm173, 0.0
        %186 = vst.msk [vmem:[%s168 + $0x60] sm:$0xff] %vm173, 0.0
        %187 = vst.msk [vmem:[%s168 + $0x68] sm:$0xff] %vm173, 0.0
        %188 = vst.msk [vmem:[%s168 + $0x70] sm:$0xff] %vm173, 0.0
        %189 = vst.msk [vmem:[%s168 + $0x78] sm:$0xff] %vm173, 0.0
      $region28: #{voxel_module_forward.1} parent=23 // pred_fallthru
        _
      %v190 = vlaneseq
      %v191 = vand.u32 %v190, 127
      %v192 = vld [vmem:[%s157] sm:$0xff]
      %v193 = vld [vmem:[%s157 + $0x8] sm:$0xff]
      %v194 = vld [vmem:[%s157 + $0x10] sm:$0xff]
      %v195 = vld [vmem:[%s157 + $0x18] sm:$0xff]
      %v196 = vld [vmem:[%s157 + $0x20] sm:$0xff]
      %v197 = vld [vmem:[%s157 + $0x28] sm:$0xff]
      %v198 = vld [vmem:[%s157 + $0x30] sm:$0xff]
      %v199 = vld [vmem:[%s157 + $0x38] sm:$0xff]
      %v200 = vld [vmem:[%s157 + $0x40] sm:$0xff]
      %v201 = vld [vmem:[%s157 + $0x48] sm:$0xff]
      %v202 = vld [vmem:[%s157 + $0x50] sm:$0xff]
      %v203 = vld [vmem:[%s157 + $0x58] sm:$0xff]
      %v204 = vld [vmem:[%s157 + $0x60] sm:$0xff]
      %v205 = vld [vmem:[%s157 + $0x68] sm:$0xff]
      %v206 = vld [vmem:[%s157 + $0x70] sm:$0xff]
      %v207 = vld [vmem:[%s157 + $0x78] sm:$0xff]
      %v208 = vmul.f32 %v192, 7.0
      %v209 = vmul.f32 %v193, 7.0
      %v210 = vmul.f32 %v194, 7.0
      %v211 = vmul.f32 %v195, 7.0
      %v212 = vmul.f32 %v196, 7.0
      %v213 = vmul.f32 %v197, 7.0
      %v214 = vmul.f32 %v198, 7.0
      %v215 = vmul.f32 %v199, 7.0
      %v216 = vmul.f32 %v200, 7.0
      %v217 = vmul.f32 %v201, 7.0
      %v218 = vmul.f32 %v202, 7.0
      %v219 = vmul.f32 %v203, 7.0
      %v220 = vmul.f32 %v204, 7.0
      %v221 = vmul.f32 %v205, 7.0
      %v222 = vmul.f32 %v206, 7.0
      %v223 = vmul.f32 %v207, 7.0
      %v224 = vcvt.f32.s32.to.zero.pseudo %v208
      %v225 = vcvt.f32.s32.to.zero.pseudo %v209
      %v226 = vcvt.f32.s32.to.zero.pseudo %v210
      %v227 = vcvt.f32.s32.to.zero.pseudo %v211
      %v228 = vcvt.f32.s32.to.zero.pseudo %v212
      %v229 = vcvt.f32.s32.to.zero.pseudo %v213
      %v230 = vcvt.f32.s32.to.zero.pseudo %v214
      %v231 = vcvt.f32.s32.to.zero.pseudo %v215
      %v232 = vcvt.f32.s32.to.zero.pseudo %v216
      %v233 = vcvt.f32.s32.to.zero.pseudo %v217
      %v234 = vcvt.f32.s32.to.zero.pseudo %v218
      %v235 = vcvt.f32.s32.to.zero.pseudo %v219
      %v236 = vcvt.f32.s32.to.zero.pseudo %v220
      %v237 = vcvt.f32.s32.to.zero.pseudo %v221
      %v238 = vcvt.f32.s32.to.zero.pseudo %v222
      %v239 = vcvt.f32.s32.to.zero.pseudo %v223
      %v240 = vmul.u32 %v224, 64
      %v241 = vmul.u32 %v225, 64
      %v242 = vmul.u32 %v226, 64
      %v243 = vmul.u32 %v227, 64
      %v244 = vmul.u32 %v228, 64
      %v245 = vmul.u32 %v229, 64
      %v246 = vmul.u32 %v230, 64
      %v247 = vmul.u32 %v231, 64
      %v248 = vmul.u32 %v232, 64
      %v249 = vmul.u32 %v233, 64
      %v250 = vmul.u32 %v234, 64
      %v251 = vmul.u32 %v235, 64
      %v252 = vmul.u32 %v236, 64
      %v253 = vmul.u32 %v237, 64
      %v254 = vmul.u32 %v238, 64
      %v255 = vmul.u32 %v239, 64
      %v256 = vmul.u32 %v224, 8
      %v257 = vmul.u32 %v225, 8
      %v258 = vmul.u32 %v226, 8
      %v259 = vmul.u32 %v227, 8
      %v260 = vmul.u32 %v228, 8
      %v261 = vmul.u32 %v229, 8
      %v262 = vmul.u32 %v230, 8
      %v263 = vmul.u32 %v231, 8
      %v264 = vmul.u32 %v232, 8
      %v265 = vmul.u32 %v233, 8
      %v266 = vmul.u32 %v234, 8
      %v267 = vmul.u32 %v235, 8
      %v268 = vmul.u32 %v236, 8
      %v269 = vmul.u32 %v237, 8
      %v270 = vmul.u32 %v238, 8
      %v271 = vmul.u32 %v239, 8
      %272 = vrot.lane.b32.xlu0 %v256, 127
      %v273 = vpop.permute.xlu0 %272
      %274 = vrot.lane.b32.xlu0 %v257, 127
      %v275 = vpop.permute.xlu0 %274
      %276 = vrot.lane.b32.xlu0 %v258, 127
      %v277 = vpop.permute.xlu0 %276
      %278 = vrot.lane.b32.xlu0 %v259, 127
      %v279 = vpop.permute.xlu0 %278
      %280 = vrot.lane.b32.xlu0 %v260, 127
      %v281 = vpop.permute.xlu0 %280
      %282 = vrot.lane.b32.xlu0 %v261, 127
      %v283 = vpop.permute.xlu0 %282
      %284 = vrot.lane.b32.xlu0 %v262, 127
      %v285 = vpop.permute.xlu0 %284
      %286 = vrot.lane.b32.xlu0 %v263, 127
      %v287 = vpop.permute.xlu0 %286
      %288 = vrot.lane.b32.xlu0 %v264, 127
      %v289 = vpop.permute.xlu0 %288
      %290 = vrot.lane.b32.xlu0 %v265, 127
      %v291 = vpop.permute.xlu0 %290
      %292 = vrot.lane.b32.xlu0 %v266, 127
      %v293 = vpop.permute.xlu0 %292
      %294 = vrot.lane.b32.xlu0 %v267, 127
      %v295 = vpop.permute.xlu0 %294
      %296 = vrot.lane.b32.xlu0 %v268, 127
      %v297 = vpop.permute.xlu0 %296
      %298 = vrot.lane.b32.xlu0 %v269, 127
      %v299 = vpop.permute.xlu0 %298
      %300 = vrot.lane.b32.xlu0 %v270, 127
      %v301 = vpop.permute.xlu0 %300
      %302 = vrot.lane.b32.xlu0 %v271, 127
      %v303 = vpop.permute.xlu0 %302
      %v304 = vadd.s32 %v240, %v273
      %v305 = vadd.s32 %v241, %v275
      %v306 = vadd.s32 %v242, %v277
      %v307 = vadd.s32 %v243, %v279
      %v308 = vadd.s32 %v244, %v281
      %v309 = vadd.s32 %v245, %v283
      %v310 = vadd.s32 %v246, %v285
      %v311 = vadd.s32 %v247, %v287
      %v312 = vadd.s32 %v248, %v289
      %v313 = vadd.s32 %v249, %v291
      %v314 = vadd.s32 %v250, %v293
      %v315 = vadd.s32 %v251, %v295
      %v316 = vadd.s32 %v252, %v297
      %v317 = vadd.s32 %v253, %v299
      %v318 = vadd.s32 %v254, %v301
      %v319 = vadd.s32 %v255, %v303
      %320 = vrot.lane.b32.xlu0 %v224, 126
      %v321 = vpop.permute.xlu0 %320
      %322 = vrot.lane.b32.xlu0 %v225, 126
      %v323 = vpop.permute.xlu0 %322
      %324 = vrot.lane.b32.xlu0 %v226, 126
      %v325 = vpop.permute.xlu0 %324
      %326 = vrot.lane.b32.xlu0 %v227, 126
      %v327 = vpop.permute.xlu0 %326
      %328 = vrot.lane.b32.xlu0 %v228, 126
      %v329 = vpop.permute.xlu0 %328
      %330 = vrot.lane.b32.xlu0 %v229, 126
      %v331 = vpop.permute.xlu0 %330
      %332 = vrot.lane.b32.xlu0 %v230, 126
      %v333 = vpop.permute.xlu0 %332
      %334 = vrot.lane.b32.xlu0 %v231, 126
      %v335 = vpop.permute.xlu0 %334
      %336 = vrot.lane.b32.xlu0 %v232, 126
      %v337 = vpop.permute.xlu0 %336
      %338 = vrot.lane.b32.xlu0 %v233, 126
      %v339 = vpop.permute.xlu0 %338
      %340 = vrot.lane.b32.xlu0 %v234, 126
      %v341 = vpop.permute.xlu0 %340
      %342 = vrot.lane.b32.xlu0 %v235, 126
      %v343 = vpop.permute.xlu0 %342
      %344 = vrot.lane.b32.xlu0 %v236, 126
      %v345 = vpop.permute.xlu0 %344
      %346 = vrot.lane.b32.xlu0 %v237, 126
      %v347 = vpop.permute.xlu0 %346
      %348 = vrot.lane.b32.xlu0 %v238, 126
      %v349 = vpop.permute.xlu0 %348
      %350 = vrot.lane.b32.xlu0 %v239, 126
      %v351 = vpop.permute.xlu0 %350
      %v352 = vadd.s32 %v304, %v321
      %v353 = vadd.s32 %v305, %v323
      %v354 = vadd.s32 %v306, %v325
      %v355 = vadd.s32 %v307, %v327
      %v356 = vadd.s32 %v308, %v329
      %v357 = vadd.s32 %v309, %v331
      %v358 = vadd.s32 %v310, %v333
      %v359 = vadd.s32 %v311, %v335
      %v360 = vadd.s32 %v312, %v337
      %v361 = vadd.s32 %v313, %v339
      %v362 = vadd.s32 %v314, %v341
      %v363 = vadd.s32 %v315, %v343
      %v364 = vadd.s32 %v316, %v345
      %v365 = vadd.s32 %v317, %v347
      %v366 = vadd.s32 %v318, %v349
      %v367 = vadd.s32 %v319, %v351
      %v368 = vand.u32 %v352, 127
      %v369 = vand.u32 %v353, 127
      %v370 = vand.u32 %v354, 127
      %v371 = vand.u32 %v355, 127
      %v372 = vand.u32 %v356, 127
      %v373 = vand.u32 %v357, 127
      %v374 = vand.u32 %v358, 127
      %v375 = vand.u32 %v359, 127
      %v376 = vand.u32 %v360, 127
      %v377 = vand.u32 %v361, 127
      %v378 = vand.u32 %v362, 127
      %v379 = vand.u32 %v363, 127
      %v380 = vand.u32 %v364, 127
      %v381 = vand.u32 %v365, 127
      %v382 = vand.u32 %v366, 127
      %v383 = vand.u32 %v367, 127
      %384 = vset.pattern.permute.xlu0 0
      %385 = vperm.xlu0 %384, %v368
      %v386 = vpop.permute.xlu0 %385
      %387 = vset.pattern.permute.xlu0 0
      %388 = vperm.xlu0 %387, %v369
      %v389 = vpop.permute.xlu0 %388
      %390 = vset.pattern.permute.xlu0 0
      %391 = vperm.xlu0 %390, %v370
      %v392 = vpop.permute.xlu0 %391
      %393 = vset.pattern.permute.xlu0 0
      %394 = vperm.xlu0 %393, %v371
      %v395 = vpop.permute.xlu0 %394
      %396 = vset.pattern.permute.xlu0 0
      %397 = vperm.xlu0 %396, %v372
      %v398 = vpop.permute.xlu0 %397
      %399 = vset.pattern.permute.xlu0 0
      %400 = vperm.xlu0 %399, %v373
      %v401 = vpop.permute.xlu0 %400
      %402 = vset.pattern.permute.xlu0 0
      %403 = vperm.xlu0 %402, %v374
      %v404 = vpop.permute.xlu0 %403
      %405 = vset.pattern.permute.xlu0 0
      %406 = vperm.xlu0 %405, %v375
      %v407 = vpop.permute.xlu0 %406
      %408 = vset.pattern.permute.xlu0 0
      %409 = vperm.xlu0 %408, %v376
      %v410 = vpop.permute.xlu0 %409
      %411 = vset.pattern.permute.xlu0 0
      %412 = vperm.xlu0 %411, %v377
      %v413 = vpop.permute.xlu0 %412
      %414 = vset.pattern.permute.xlu0 0
      %415 = vperm.xlu0 %414, %v378
      %v416 = vpop.permute.xlu0 %415
      %417 = vset.pattern.permute.xlu0 0
      %418 = vperm.xlu0 %417, %v379
      %v419 = vpop.permute.xlu0 %418
      %420 = vset.pattern.permute.xlu0 0
      %421 = vperm.xlu0 %420, %v380
      %v422 = vpop.permute.xlu0 %421
      %423 = vset.pattern.permute.xlu0 0
      %424 = vperm.xlu0 %423, %v381
      %v425 = vpop.permute.xlu0 %424
      %426 = vset.pattern.permute.xlu0 0
      %427 = vperm.xlu0 %426, %v382
      %v428 = vpop.permute.xlu0 %427
      %429 = vset.pattern.permute.xlu0 0
      %430 = vperm.xlu0 %429, %v383
      %v431 = vpop.permute.xlu0 %430
      %vm432 = vcmp.eq.s32.totalorder %v386, %v191
      %vm433 = vcmp.eq.s32.totalorder %v389, %v191
      %vm434 = vcmp.eq.s32.totalorder %v392, %v191
      %vm435 = vcmp.eq.s32.totalorder %v395, %v191
      %vm436 = vcmp.eq.s32.totalorder %v398, %v191
      %vm437 = vcmp.eq.s32.totalorder %v401, %v191
      %vm438 = vcmp.eq.s32.totalorder %v404, %v191
      %vm439 = vcmp.eq.s32.totalorder %v407, %v191
      %vm440 = vcmp.eq.s32.totalorder %v410, %v191
      %vm441 = vcmp.eq.s32.totalorder %v413, %v191
      %vm442 = vcmp.eq.s32.totalorder %v416, %v191
      %vm443 = vcmp.eq.s32.totalorder %v419, %v191
      %vm444 = vcmp.eq.s32.totalorder %v422, %v191
      %vm445 = vcmp.eq.s32.totalorder %v425, %v191
      %vm446 = vcmp.eq.s32.totalorder %v428, %v191
      %vm447 = vcmp.eq.s32.totalorder %v431, %v191
      %v448 = vsel %vm432, 1, 0
      %v449 = vsel %vm433, 1, 0
      %v450 = vsel %vm434, 1, 0
      %v451 = vsel %vm435, 1, 0
      %v452 = vsel %vm436, 1, 0
      %v453 = vsel %vm437, 1, 0
      %v454 = vsel %vm438, 1, 0
      %v455 = vsel %vm439, 1, 0
      %v456 = vsel %vm440, 1, 0
      %v457 = vsel %vm441, 1, 0
      %v458 = vsel %vm442, 1, 0
      %v459 = vsel %vm443, 1, 0
      %v460 = vsel %vm444, 1, 0
      %v461 = vsel %vm445, 1, 0
      %v462 = vsel %vm446, 1, 0
      %v463 = vsel %vm447, 1, 0
      %v464 = vcvt.s32.f32 %v448
      %v465 = vcvt.s32.f32 %v449
      %v466 = vcvt.s32.f32 %v450
      %v467 = vcvt.s32.f32 %v451
      %v468 = vcvt.s32.f32 %v452
      %v469 = vcvt.s32.f32 %v453
      %v470 = vcvt.s32.f32 %v454
      %v471 = vcvt.s32.f32 %v455
      %v472 = vcvt.s32.f32 %v456
      %v473 = vcvt.s32.f32 %v457
      %v474 = vcvt.s32.f32 %v458
      %v475 = vcvt.s32.f32 %v459
      %v476 = vcvt.s32.f32 %v460
      %v477 = vcvt.s32.f32 %v461
      %v478 = vcvt.s32.f32 %v462
      %v479 = vcvt.s32.f32 %v463
      %v480 = vshra.s32 %v352, 7
      %v481 = vshra.s32 %v353, 7
      %v482 = vshra.s32 %v354, 7
      %v483 = vshra.s32 %v355, 7
      %v484 = vshra.s32 %v356, 7
      %v485 = vshra.s32 %v357, 7
      %v486 = vshra.s32 %v358, 7
      %v487 = vshra.s32 %v359, 7
      %v488 = vshra.s32 %v360, 7
      %v489 = vshra.s32 %v361, 7
      %v490 = vshra.s32 %v362, 7
      %v491 = vshra.s32 %v363, 7
      %v492 = vshra.s32 %v364, 7
      %v493 = vshra.s32 %v365, 7
      %v494 = vshra.s32 %v366, 7
      %v495 = vshra.s32 %v367, 7
      %496 = vset.pattern.permute.xlu0 0
      %497 = vperm.xlu0 %496, %v480
      %v498 = vpop.permute.xlu0 %497
      %499 = vset.pattern.permute.xlu0 0
      %500 = vperm.xlu0 %499, %v481
      %v501 = vpop.permute.xlu0 %500
      %502 = vset.pattern.permute.xlu0 0
      %503 = vperm.xlu0 %502, %v482
      %v504 = vpop.permute.xlu0 %503
      %505 = vset.pattern.permute.xlu0 0
      %506 = vperm.xlu0 %505, %v483
      %v507 = vpop.permute.xlu0 %506
      %508 = vset.pattern.permute.xlu0 0
      %509 = vperm.xlu0 %508, %v484
      %v510 = vpop.permute.xlu0 %509
      %511 = vset.pattern.permute.xlu0 0
      %512 = vperm.xlu0 %511, %v485
      %v513 = vpop.permute.xlu0 %512
      %514 = vset.pattern.permute.xlu0 0
      %515 = vperm.xlu0 %514, %v486
      %v516 = vpop.permute.xlu0 %515
      %517 = vset.pattern.permute.xlu0 0
      %518 = vperm.xlu0 %517, %v487
      %v519 = vpop.permute.xlu0 %518
      %520 = vset.pattern.permute.xlu0 0
      %521 = vperm.xlu0 %520, %v488
      %v522 = vpop.permute.xlu0 %521
      %523 = vset.pattern.permute.xlu0 0
      %524 = vperm.xlu0 %523, %v489
      %v525 = vpop.permute.xlu0 %524
      %526 = vset.pattern.permute.xlu0 0
      %527 = vperm.xlu0 %526, %v490
      %v528 = vpop.permute.xlu0 %527
      %529 = vset.pattern.permute.xlu0 0
      %530 = vperm.xlu0 %529, %v491
      %v531 = vpop.permute.xlu0 %530
      %532 = vset.pattern.permute.xlu0 0
      %533 = vperm.xlu0 %532, %v492
      %v534 = vpop.permute.xlu0 %533
      %535 = vset.pattern.permute.xlu0 0
      %536 = vperm.xlu0 %535, %v493
      %v537 = vpop.permute.xlu0 %536
      %538 = vset.pattern.permute.xlu0 0
      %539 = vperm.xlu0 %538, %v494
      %v540 = vpop.permute.xlu0 %539
      %541 = vset.pattern.permute.xlu0 0
      %542 = vperm.xlu0 %541, %v495
      %v543 = vpop.permute.xlu0 %542
      %vm544 = vcmp.eq.s32.totalorder %v498, %v191
      %vm545 = vcmp.eq.s32.totalorder %v501, %v191
      %vm546 = vcmp.eq.s32.totalorder %v504, %v191
      %vm547 = vcmp.eq.s32.totalorder %v507, %v191
      %vm548 = vcmp.eq.s32.totalorder %v510, %v191
      %vm549 = vcmp.eq.s32.totalorder %v513, %v191
      %vm550 = vcmp.eq.s32.totalorder %v516, %v191
      %vm551 = vcmp.eq.s32.totalorder %v519, %v191
      %vm552 = vcmp.eq.s32.totalorder %v522, %v191
      %vm553 = vcmp.eq.s32.totalorder %v525, %v191
      %vm554 = vcmp.eq.s32.totalorder %v528, %v191
      %vm555 = vcmp.eq.s32.totalorder %v531, %v191
      %vm556 = vcmp.eq.s32.totalorder %v534, %v191
      %vm557 = vcmp.eq.s32.totalorder %v537, %v191
      %vm558 = vcmp.eq.s32.totalorder %v540, %v191
      %vm559 = vcmp.eq.s32.totalorder %v543, %v191
      %v560 = vsel %vm544, 1, 0
      %v561 = vsel %vm545, 1, 0
      %v562 = vsel %vm546, 1, 0
      %v563 = vsel %vm547, 1, 0
      %v564 = vsel %vm548, 1, 0
      %v565 = vsel %vm549, 1, 0
      %v566 = vsel %vm550, 1, 0
      %v567 = vsel %vm551, 1, 0
      %v568 = vsel %vm552, 1, 0
      %v569 = vsel %vm553, 1, 0
      %v570 = vsel %vm554, 1, 0
      %v571 = vsel %vm555, 1, 0
      %v572 = vsel %vm556, 1, 0
      %v573 = vsel %vm557, 1, 0
      %v574 = vsel %vm558, 1, 0
      %v575 = vsel %vm559, 1, 0
      %v576 = vcvt.s32.f32 %v560
      %v577 = vcvt.s32.f32 %v561
      %v578 = vcvt.s32.f32 %v562
      %v579 = vcvt.s32.f32 %v563
      %v580 = vcvt.s32.f32 %v564
      %v581 = vcvt.s32.f32 %v565
      %v582 = vcvt.s32.f32 %v566
      %v583 = vcvt.s32.f32 %v567
      %v584 = vcvt.s32.f32 %v568
      %v585 = vcvt.s32.f32 %v569
      %v586 = vcvt.s32.f32 %v570
      %v587 = vcvt.s32.f32 %v571
      %v588 = vcvt.s32.f32 %v572
      %v589 = vcvt.s32.f32 %v573
      %v590 = vcvt.s32.f32 %v574
      %v591 = vcvt.s32.f32 %v575
      %592 = vxpose.xlu0.b32.start [1/16] %v464, 128
      %593 = vxpose.xlu0.b32.cont [2/16] %v465, 128
      %594 = vxpose.xlu0.b32.cont [3/16] %v466, 128
      %595 = vxpose.xlu0.b32.cont [4/16] %v467, 128
      %596 = vxpose.xlu0.b32.cont [5/16] %v468, 128
      %597 = vxpose.xlu0.b32.cont [6/16] %v469, 128
      %598 = vxpose.xlu0.b32.cont [7/16] %v470, 128
      %599 = vxpose.xlu0.b32.cont [8/16] %v471, 128
      %600 = vxpose.xlu0.b32.cont [9/16] %v472, 128
      %601 = vxpose.xlu0.b32.cont [10/16] %v473, 128
      %602 = vxpose.xlu0.b32.cont [11/16] %v474, 128
      %603 = vxpose.xlu0.b32.cont [12/16] %v475, 128
      %604 = vxpose.xlu0.b32.cont [13/16] %v476, 128
      %605 = vxpose.xlu0.b32.cont [14/16] %v477, 128
      %606 = vxpose.xlu0.b32.cont [15/16] %v478, 128
      %607 = vxpose.xlu0.b32.end [16/16] %v479, 128
      %v608 = vpop.trf.xlu0
      %v609 = vpop.trf.xlu0
      %v610 = vpop.trf.xlu0
      %v611 = vpop.trf.xlu0
      %v612 = vpop.trf.xlu0
      %v613 = vpop.trf.xlu0
      %v614 = vpop.trf.xlu0
      %v615 = vpop.trf.xlu0
      %v616 = vpop.trf.xlu0
      %v617 = vpop.trf.xlu0
      %v618 = vpop.trf.xlu0
      %v619 = vpop.trf.xlu0
      %v620 = vpop.trf.xlu0
      %v621 = vpop.trf.xlu0
      %v622 = vpop.trf.xlu0
      %v623 = vpop.trf.xlu0
      %624 = vmatprep.subr.mxu0 0.0
      %625 = vmatpush1.msra.mxu0 %v591
      %626 = vmatprep.subr.mxu0 0.0
      %627 = vmatpush1.msra.mxu0 %v590
      %628 = vmatprep.subr.mxu0 0.0
      %629 = vmatpush1.msra.mxu0 %v589
      %630 = vmatprep.subr.mxu0 0.0
      %631 = vmatpush1.msra.mxu0 %v588
      %632 = vmatprep.subr.mxu0 0.0
      %633 = vmatpush1.msra.mxu0 %v587
      %634 = vmatprep.subr.mxu0 0.0
      %635 = vmatpush1.msra.mxu0 %v586
      %636 = vmatprep.subr.mxu0 0.0
      %637 = vmatpush1.msra.mxu0 %v585
      %638 = vmatprep.subr.mxu0 0.0
      %639 = vmatpush1.msra.mxu0 %v584
      %640 = vmatprep.subr.mxu0 0.0
      %641 = vmatpush1.msra.mxu0 %v583
      %642 = vmatprep.subr.mxu0 0.0
      %643 = vmatpush1.msra.mxu0 %v582
      %644 = vmatprep.subr.mxu0 0.0
      %645 = vmatpush1.msra.mxu0 %v581
      %646 = vmatprep.subr.mxu0 0.0
      %647 = vmatpush1.msra.mxu0 %v580
      %648 = vmatprep.subr.mxu0 0.0
      %649 = vmatpush1.msra.mxu0 %v579
      %650 = vmatprep.subr.mxu0 0.0
      %651 = vmatpush1.msra.mxu0 %v578
      %652 = vmatprep.subr.mxu0 0.0
      %653 = vmatpush1.msra.mxu0 %v577
      %654 = vmatprep.subr.mxu0 0.0
      %655 = vmatpush1.msra.mxu0 %v576
      %656 = vmatprep.subr.mxu0 0.0
      %657 = vmatpush2.msra.mxu0 0.0
      %658 = vmatprep.subr.mxu0 0.0
      %659 = vmatpush2.msra.mxu0 0.0
      %660 = vmatprep.subr.mxu0 0.0
      %661 = vmatpush2.msra.mxu0 0.0
      %662 = vmatprep.subr.mxu0 0.0
      %663 = vmatpush2.msra.mxu0 0.0
      %664 = vmatprep.subr.mxu0 0.0
      %665 = vmatpush2.msra.mxu0 0.0
      %666 = vmatprep.subr.mxu0 0.0
      %667 = vmatpush2.msra.mxu0 0.0
      %668 = vmatprep.subr.mxu0 0.0
      %669 = vmatpush2.msra.mxu0 0.0
      %670 = vmatprep.subr.mxu0 0.0
      %671 = vmatpush2.msra.mxu0 0.0
      %672 = vmatprep.subr.mxu0 0.0
      %673 = vmatpush2.msra.mxu0 0.0
      %674 = vmatprep.subr.mxu0 0.0
      %675 = vmatpush2.msra.mxu0 0.0
      %676 = vmatprep.subr.mxu0 0.0
      %677 = vmatpush2.msra.mxu0 0.0
      %678 = vmatprep.subr.mxu0 0.0
      %679 = vmatpush2.msra.mxu0 0.0
      %680 = vmatprep.subr.mxu0 0.0
      %681 = vmatpush2.msra.mxu0 0.0
      %682 = vmatprep.subr.mxu0 0.0
      %683 = vmatpush2.msra.mxu0 0.0
      %684 = vmatprep.subr.mxu0 0.0
      %685 = vmatpush2.msra.mxu0 0.0
      %686 = vmatprep.subr.mxu0 0.0
      %687 = vmatpush2.msra.mxu0 0.0
      %688 = vmatprep.mubr.f32.mxu0 0.0
      %689 = vmatmul.mubr.f32.gmra.mxu0 %v608
      %v690 = vpop.f32.mrf.mxu0
      %v691 = vadd.f32 0.0, %v690
      %v692 = vpop.f32.mrf.mxu0
      %693 = vmatprep.mubr.f32.mxu0 0.0
      %694 = vmatmul.mubr.f32.gmra.mxu0 %v609
      %v695 = vpop.f32.mrf.mxu0
      %v696 = vadd.f32 0.0, %v695
      %v697 = vpop.f32.mrf.mxu0
      %698 = vmatprep.mubr.f32.mxu0 0.0
      %699 = vmatmul.mubr.f32.gmra.mxu0 %v610
      %v700 = vpop.f32.mrf.mxu0
      %v701 = vadd.f32 0.0, %v700
      %v702 = vpop.f32.mrf.mxu0
      %703 = vmatprep.mubr.f32.mxu0 0.0
      %704 = vmatmul.mubr.f32.gmra.mxu0 %v611
      %v705 = vpop.f32.mrf.mxu0
      %v706 = vadd.f32 0.0, %v705
      %v707 = vpop.f32.mrf.mxu0
      %708 = vmatprep.mubr.f32.mxu0 0.0
      %709 = vmatmul.mubr.f32.gmra.mxu0 %v612
      %v710 = vpop.f32.mrf.mxu0
      %v711 = vadd.f32 0.0, %v710
      %v712 = vpop.f32.mrf.mxu0
      %713 = vmatprep.mubr.f32.mxu0 0.0
      %714 = vmatmul.mubr.f32.gmra.mxu0 %v613
      %v715 = vpop.f32.mrf.mxu0
      %v716 = vadd.f32 0.0, %v715
      %v717 = vpop.f32.mrf.mxu0
      %718 = vmatprep.mubr.f32.mxu0 0.0
      %719 = vmatmul.mubr.f32.gmra.mxu0 %v614
      %v720 = vpop.f32.mrf.mxu0
      %v721 = vadd.f32 0.0, %v720
      %v722 = vpop.f32.mrf.mxu0
      %723 = vmatprep.mubr.f32.mxu0 0.0
      %724 = vmatmul.mubr.f32.gmra.mxu0 %v615
      %v725 = vpop.f32.mrf.mxu0
      %v726 = vadd.f32 0.0, %v725
      %v727 = vpop.f32.mrf.mxu0
      %728 = vmatprep.mubr.f32.mxu0 0.0
      %729 = vmatmul.mubr.f32.gmra.mxu0 %v616
      %v730 = vpop.f32.mrf.mxu0
      %v731 = vadd.f32 0.0, %v730
      %v732 = vpop.f32.mrf.mxu0
      %733 = vmatprep.mubr.f32.mxu0 0.0
      %734 = vmatmul.mubr.f32.gmra.mxu0 %v617
      %v735 = vpop.f32.mrf.mxu0
      %v736 = vadd.f32 0.0, %v735
      %v737 = vpop.f32.mrf.mxu0
      %738 = vmatprep.mubr.f32.mxu0 0.0
      %739 = vmatmul.mubr.f32.gmra.mxu0 %v618
      %v740 = vpop.f32.mrf.mxu0
      %v741 = vadd.f32 0.0, %v740
      %v742 = vpop.f32.mrf.mxu0
      %743 = vmatprep.mubr.f32.mxu0 0.0
      %744 = vmatmul.mubr.f32.gmra.mxu0 %v619
      %v745 = vpop.f32.mrf.mxu0
      %v746 = vadd.f32 0.0, %v745
      %v747 = vpop.f32.mrf.mxu0
      %748 = vmatprep.mubr.f32.mxu0 0.0
      %749 = vmatmul.mubr.f32.gmra.mxu0 %v620
      %v750 = vpop.f32.mrf.mxu0
      %v751 = vadd.f32 0.0, %v750
      %v752 = vpop.f32.mrf.mxu0
      %753 = vmatprep.mubr.f32.mxu0 0.0
      %754 = vmatmul.mubr.f32.gmra.mxu0 %v621
      %v755 = vpop.f32.mrf.mxu0
      %v756 = vadd.f32 0.0, %v755
      %v757 = vpop.f32.mrf.mxu0
      %758 = vmatprep.mubr.f32.mxu0 0.0
      %759 = vmatmul.mubr.f32.gmra.mxu0 %v622
      %v760 = vpop.f32.mrf.mxu0
      %v761 = vadd.f32 0.0, %v760
      %v762 = vpop.f32.mrf.mxu0
      %763 = vmatprep.mubr.f32.mxu0 0.0
      %764 = vmatmul.mubr.f32.gmra.mxu0 %v623
      %v765 = vpop.f32.mrf.mxu0
      %v766 = vadd.f32 0.0, %v765
      %v767 = vpop.f32.mrf.mxu0
      %768 = vdwg.mxu0
      %v769 = vld [vmem:[%s168] sm:$0xff]
      %v770 = vld [vmem:[%s168 + $0x8] sm:$0xff]
      %v771 = vld [vmem:[%s168 + $0x10] sm:$0xff]
      %v772 = vld [vmem:[%s168 + $0x18] sm:$0xff]
      %v773 = vld [vmem:[%s168 + $0x20] sm:$0xff]
      %v774 = vld [vmem:[%s168 + $0x28] sm:$0xff]
      %v775 = vld [vmem:[%s168 + $0x30] sm:$0xff]
      %v776 = vld [vmem:[%s168 + $0x38] sm:$0xff]
      %v777 = vld [vmem:[%s168 + $0x40] sm:$0xff]
      %v778 = vld [vmem:[%s168 + $0x48] sm:$0xff]
      %v779 = vld [vmem:[%s168 + $0x50] sm:$0xff]
      %v780 = vld [vmem:[%s168 + $0x58] sm:$0xff]
      %v781 = vld [vmem:[%s168 + $0x60] sm:$0xff]
      %v782 = vld [vmem:[%s168 + $0x68] sm:$0xff]
      %v783 = vld [vmem:[%s168 + $0x70] sm:$0xff]
      %v784 = vld [vmem:[%s168 + $0x78] sm:$0xff]
      %v785 = vadd.f32 %v769, %v691
      %v786 = vadd.f32 %v770, %v696
      %v787 = vadd.f32 %v771, %v701
      %v788 = vadd.f32 %v772, %v706
      %v789 = vadd.f32 %v773, %v711
      %v790 = vadd.f32 %v774, %v716
      %v791 = vadd.f32 %v775, %v721
      %v792 = vadd.f32 %v776, %v726
      %v793 = vadd.f32 %v777, %v731
      %v794 = vadd.f32 %v778, %v736
      %v795 = vadd.f32 %v779, %v741
      %v796 = vadd.f32 %v780, %v746
      %v797 = vadd.f32 %v781, %v751
      %v798 = vadd.f32 %v782, %v756
      %v799 = vadd.f32 %v783, %v761
      %v800 = vadd.f32 %v784, %v766
      %vm801 = vcmask 31744
      %802 = vst.msk [vmem:[%s168] sm:$0xff] %vm801, %v785
      %803 = vst.msk [vmem:[%s168 + $0x8] sm:$0xff] %vm801, %v786
      %804 = vst.msk [vmem:[%s168 + $0x10] sm:$0xff] %vm801, %v787
      %805 = vst.msk [vmem:[%s168 + $0x18] sm:$0xff] %vm801, %v788
      %806 = vst.msk [vmem:[%s168 + $0x20] sm:$0xff] %vm801, %v789
      %807 = vst.msk [vmem:[%s168 + $0x28] sm:$0xff] %vm801, %v790
      %808 = vst.msk [vmem:[%s168 + $0x30] sm:$0xff] %vm801, %v791
      %809 = vst.msk [vmem:[%s168 + $0x38] sm:$0xff] %vm801, %v792
      %810 = vst.msk [vmem:[%s168 + $0x40] sm:$0xff] %vm801, %v793
      %811 = vst.msk [vmem:[%s168 + $0x48] sm:$0xff] %vm801, %v794
      %812 = vst.msk [vmem:[%s168 + $0x50] sm:$0xff] %vm801, %v795
      %813 = vst.msk [vmem:[%s168 + $0x58] sm:$0xff] %vm801, %v796
      %814 = vst.msk [vmem:[%s168 + $0x60] sm:$0xff] %vm801, %v797
      %815 = vst.msk [vmem:[%s168 + $0x68] sm:$0xff] %vm801, %v798
      %816 = vst.msk [vmem:[%s168 + $0x70] sm:$0xff] %vm801, %v799
      %817 = vst.msk [vmem:[%s168 + $0x78] sm:$0xff] %vm801, %v800
      %p818 = scmp.lt.s32.totalorder %s17, 1
      %s819 = scalar_select %p818, %s17, 1
      %p820 = scmp.lt.s32.totalorder %s18, 0
      %s821 = scalar_select %p820, %s18, 0
      %s822 = smul.addr %s821, 16
      %s823 = smul.addr %s819, 16
      %s824 = sadd.s32 %s822, %s823
      %s825 = smul.addr %s824, 8
      %s826 = scalar_lea.vmem %s1, %s825
      // Predicated region
      $region29: #{voxel_module_forward.1} parent=23 // pred_check
        %p827 = pneg %p81
      $region30: #{voxel_module_forward.1} parent=23 // pred_check_branch
        %829 = sbr.rel (%p827) target = $region32
      $region31: #{voxel_module_forward.1} parent=23 // pred_region
        _
      $region32: #{voxel_module_forward.1} parent=23 // pred_fallthru
        _
    $region24: #{voxel_module_forward.1} parent=5 // pred_fallthru
      _
    %p830 = scmp.le.s32.totalorder 2, %s7
    // Predicated region
    $region33: #{voxel_module_forward.1} parent=5 // pred_check
      %p831 = pneg %p830
    $region34: #{voxel_module_forward.1} parent=5 // pred_check_branch
      %833 = sbr.rel (%p831) target = $region36
    $region35: #{voxel_module_forward.1} parent=5 // pred_region
      %s834 = ssub.s32 %s7, 2
      // Predicated region
      $region37: #{voxel_module_forward.1} parent=35 // pred_check
        %p835 = pneg %p87
      $region38: #{voxel_module_forward.1} parent=35 // pred_check_branch
        %837 = sbr.rel (%p835) target = $region40
      $region39: #{voxel_module_forward.1} parent=35 // pred_region
        %p838 = scmp.lt.s32.totalorder %s20, 1
        %s839 = scalar_select %p838, %s20, 1
        %p840 = scmp.lt.s32.totalorder %s21, 0
        %s841 = scalar_select %p840, %s21, 0
        %s842 = smul.addr %s841, 16
        %s843 = smul.addr %s839, 16
        %s844 = sadd.s32 %s842, %s843
        %s845 = smul.addr %s844, 8
        %s846 = scalar_lea.vmem %s1, %s845
      $region40: #{voxel_module_forward.1} parent=35 // pred_fallthru
        _
    $region36: #{voxel_module_forward.1} parent=5 // pred_fallthru
      _
  $region6: #{voxel_module_forward.1} parent=0 // loop_footer
    %s11 = sadd.s32 1, %s7
  $region7: #{voxel_module_forward.1} parent=0 // loop_footer_branch
    %6 = sbr.rel target = $region3
  $region8: #{voxel_module_forward.1} parent=0 // loop_exit
    _

</llo_original>
